<compile_context>
chip_gen: v5e
topology: v5e:2x2
jax: 0.10.0
libtpu: 0.0.40
codegen_flags: <defaults>
</compile_context>

<pallas_src>
import functools

import jax
import jax.numpy as jnp
import numpy as np
from jax.experimental import pallas as pl
from jax.experimental.pallas import tpu as pltpu


def _feat_block(fsp_ref, fcp_ref, w1a_ref, w1b_ref, bias_ref):
    # (Cout, C1) @ (C1, T) + (Cout, C2) @ (C2, T): the channel concat is folded
    # into the weight split, so `cat([fsp, fcp])` is never materialized.
    acc = jnp.dot(w1a_ref[...], fsp_ref[0], preferred_element_type=jnp.float32)
    acc = acc + jnp.dot(w1b_ref[...], fcp_ref[0], preferred_element_type=jnp.float32)
    return jnp.maximum(acc + bias_ref[...], 0.0)          # (Cout, T), f32


def _ffm_sum_kernel(fsp_ref, fcp_ref, w1a_ref, w1b_ref, bias_ref, psum_ref, *,
                    hw, tile):
    # Pass 1: partial channel sums of feat for the global average pool.
    feat = _feat_block(fsp_ref, fcp_ref, w1a_ref, w1b_ref, bias_ref)
    if hw % tile:
        # mask the ragged final spatial tile out of the pooled sum
        col = jax.lax.broadcasted_iota(jnp.int32, feat.shape, 1)
        col = col + pl.program_id(1) * tile
        feat = jnp.where(col < hw, feat, 0.0)
    psum_ref[0, 0] = jnp.sum(feat, axis=1, keepdims=True)  # (Cout, 1)


def _ffm_out_kernel(fsp_ref, fcp_ref, w1a_ref, w1b_ref, bias_ref, gate_ref, out_ref):
    # Pass 2: recompute feat for this tile and apply the per-channel gate (1 + att).
    feat = _feat_block(fsp_ref, fcp_ref, w1a_ref, w1b_ref, bias_ref)
    out_ref[0] = (feat * gate_ref[0]).astype(out_ref.dtype)


def _pick_hw_tile(hw, target):
    if hw <= target:
        return hw                       # full extent is always a legal block
    return max(128, (target // 128) * 128)


def feature_fusion_module(fsp, fcp, w_conv, gamma, beta, running_mean, running_var,
                          w_att1, w_att2, *, eps=1e-5, hw_tile_target=512):
    """Forward pass of FeatureFusionModule (eval-mode BN). NCHW in, NCHW out."""
    N, C1, H, W = fsp.shape
    _, C2, _, _ = fcp.shape
    Cout = w_conv.shape[0]
    assert w_conv.shape[1] == C1 + C2 and w_conv.shape[2] == 1 and w_conv.shape[3] == 1
    HW = H * W

    # ---- host-side weight prep (tiny, once per call) ----
    scale = (gamma / jnp.sqrt(running_var + eps)).astype(jnp.float32)      # (Cout,)
    bias = (beta - running_mean * scale).astype(jnp.float32)               # (Cout,)
    w2d = w_conv[:, :, 0, 0].astype(jnp.float32) * scale[:, None]          # BN folded
    w1a = w2d[:, :C1]                                                      # (Cout, C1)
    w1b = w2d[:, C1:]                                                      # (Cout, C2)
    bias2 = bias.reshape(Cout, 1)

    # ---- activations: NCHW -> (N, C, H*W); a free reshape, no transpose ----
    xs = fsp.reshape(N, C1, HW)
    xc = fcp.reshape(N, C2, HW)

    tile = _pick_hw_tile(HW, hw_tile_target)
    n_tiles = pl.cdiv(HW, tile)

    cparams = pltpu.CompilerParams(
        dimension_semantics=("parallel", "parallel"),
        vmem_limit_bytes=32 * 1024 * 1024)

    # ---- pass 1: per-(n, tile) partial channel sums of feat ----
    psums = pl.pallas_call(
        functools.partial(_ffm_sum_kernel, hw=HW, tile=tile),
        out_shape=jax.ShapeDtypeStruct((N, n_tiles, Cout, 1), jnp.float32),
        grid_spec=pltpu.PrefetchScalarGridSpec(
            num_scalar_prefetch=0,
            grid=(N, n_tiles),
            in_specs=[
                pl.BlockSpec((1, C1, tile), lambda n, t: (n, 0, t)),
                pl.BlockSpec((1, C2, tile), lambda n, t: (n, 0, t)),
                pl.BlockSpec((Cout, C1), lambda n, t: (0, 0)),
                pl.BlockSpec((Cout, C2), lambda n, t: (0, 0)),
                pl.BlockSpec((Cout, 1), lambda n, t: (0, 0)),
            ],
            out_specs=pl.BlockSpec((1, 1, Cout, 1), lambda n, t: (n, t, 0, 0)),
        ),
        compiler_params=cparams,
    )(xs, xc, w1a, w1b, bias2)

    # ---- tiny squeeze/excite MLP on (N, Cout): negligible traffic, plain JAX ----
    mean = psums[:, :, :, 0].sum(axis=1) / float(HW)                        # (N, Cout)
    a = jnp.maximum(mean @ w_att1[:, :, 0, 0].astype(jnp.float32).T, 0.0)   # (N, Cmid)
    a = jax.nn.sigmoid(a @ w_att2[:, :, 0, 0].astype(jnp.float32).T)        # (N, Cout)
    gate = (1.0 + a).reshape(N, Cout, 1).astype(jnp.float32)                # feat*att + feat

    # ---- pass 2: recompute feat per tile and apply the gate ----
    out = pl.pallas_call(
        _ffm_out_kernel,
        out_shape=jax.ShapeDtypeStruct((N, Cout, HW), fsp.dtype),
        grid_spec=pltpu.PrefetchScalarGridSpec(
            num_scalar_prefetch=0,
            grid=(N, n_tiles),
            in_specs=[
                pl.BlockSpec((1, C1, tile), lambda n, t: (n, 0, t)),
                pl.BlockSpec((1, C2, tile), lambda n, t: (n, 0, t)),
                pl.BlockSpec((Cout, C1), lambda n, t: (0, 0)),
                pl.BlockSpec((Cout, C2), lambda n, t: (0, 0)),
                pl.BlockSpec((Cout, 1), lambda n, t: (0, 0)),
                pl.BlockSpec((1, Cout, 1), lambda n, t: (n, 0, 0)),
            ],
            out_specs=pl.BlockSpec((1, Cout, tile), lambda n, t: (n, 0, t)),
        ),
        compiler_params=cparams,
    )(xs, xc, w1a, w1b, bias2, gate)

    return out.reshape(N, Cout, H, W)


def _reference(fsp, fcp, w_conv, gamma, beta, mean, var, w_att1, w_att2, eps=1e-5):
    fcat = jnp.concatenate([fsp, fcp], axis=1)
    y = jax.lax.conv_general_dilated(
        fcat, w_conv, window_strides=(1, 1), padding="VALID",
        dimension_numbers=("NCHW", "OIHW", "NCHW"))
    scale = gamma / jnp.sqrt(var + eps)
    bias = beta - mean * scale
    feat = jnp.maximum(y * scale[None, :, None, None] + bias[None, :, None, None], 0.0)
    att = jnp.mean(feat, axis=(2, 3), keepdims=True)                       # (N,Cout,1,1)
    att = jnp.maximum(jnp.einsum("oc,nchw->nohw", w_att1[:, :, 0, 0], att), 0.0)
    att = jax.nn.sigmoid(jnp.einsum("oc,nchw->nohw", w_att2[:, :, 0, 0], att))
    return feat * att + feat


if __name__ == "__main__":
    key = jax.random.PRNGKey(0)
    ks = jax.random.split(key, 9)

    N, C1, C2, Cout, H, W = 2, 4, 4, 16, 16, 16
    Cin = C1 + C2
    Cmid = Cout // 4

    fsp = jax.random.normal(ks[0], (N, C1, H, W), dtype=jnp.float32)
    fcp = jax.random.normal(ks[1], (N, C2, H, W), dtype=jnp.float32)

    # kaiming_normal_(a=1): gain = sqrt(2/(1+1)) = 1, std = 1/sqrt(fan_in)
    w_conv = jax.random.normal(ks[2], (Cout, Cin, 1, 1), jnp.float32) / np.sqrt(Cin)
    w_att1 = jax.random.normal(ks[3], (Cmid, Cout, 1, 1), jnp.float32) / np.sqrt(Cout)
    w_att2 = jax.random.normal(ks[4], (Cout, Cmid, 1, 1), jnp.float32) / np.sqrt(Cmid)

    # deterministic, non-trivial eval-mode BN parameters / running stats
    gamma = 1.0 + 0.1 * jax.random.normal(ks[5], (Cout,), jnp.float32)
    beta = 0.1 * jax.random.normal(ks[6], (Cout,), jnp.float32)
    running_mean = 0.1 * jax.random.normal(ks[7], (Cout,), jnp.float32)
    running_var = 1.0 + 0.1 * jax.random.uniform(ks[8], (Cout,), jnp.float32)

    out = feature_fusion_module(fsp, fcp, w_conv, gamma, beta, running_mean,
                                running_var, w_att1, w_att2)
    out = jax.block_until_ready(out)

    ref = _reference(fsp, fcp, w_conv, gamma, beta, running_mean, running_var,
                     w_att1, w_att2)
    np.testing.assert_allclose(np.asarray(out), np.asarray(ref), rtol=1e-3, atol=1e-5)

    print("KERNEL_OK")
</pallas_src>

<mosaic_0001>
module attributes {stable_mosaic.version = 11 : i64} {
  func.func @_ffm_sum_kernel(%arg0: i32, %arg1: i32, %arg2: memref<1x4x256xf32, #tpu.memory_space<vmem>>, %arg3: memref<1x4x256xf32, #tpu.memory_space<vmem>>, %arg4: memref<16x4xf32, #tpu.memory_space<vmem>>, %arg5: memref<16x4xf32, #tpu.memory_space<vmem>>, %arg6: memref<16x1xf32, #tpu.memory_space<vmem>>, %arg7: memref<1x1x16x1xf32, #tpu.memory_space<vmem>>) attributes {dimension_semantics = [#tpu.dimension_semantics<parallel>, #tpu.dimension_semantics<parallel>], iteration_bounds = array<i64: 2, 1>, scalar_prefetch = 0 : i64, scratch_operands = 0 : i64, tpu.core_type = #tpu.core_type<tc>, window_params = [{transform_indices = @transform_0, window_bounds = array<i64: 1, 4, 256>}, {transform_indices = @transform_1, window_bounds = array<i64: 1, 4, 256>}, {pipeline_mode = #tpu.pipeline_mode<synchronous>, transform_indices = @transform_2, window_bounds = array<i64: 16, 4>}, {pipeline_mode = #tpu.pipeline_mode<synchronous>, transform_indices = @transform_3, window_bounds = array<i64: 16, 4>}, {pipeline_mode = #tpu.pipeline_mode<synchronous>, transform_indices = @transform_4, window_bounds = array<i64: 16, 1>}, {transform_indices = @transform_5, window_bounds = array<i64: 1, 1, 16, 1>}]} {
    %c0 = arith.constant 0 : index
    %c0_0 = arith.constant 0 : index
    %0 = vector.load %arg4[%c0, %c0_0] : memref<16x4xf32, #tpu.memory_space<vmem>>, vector<16x4xf32>
    %c0_1 = arith.constant 0 : index
    %c0_2 = arith.constant 0 : index
    %c0_3 = arith.constant 0 : index
    %1 = vector.load %arg2[%c0_1, %c0_2, %c0_3] : memref<1x4x256xf32, #tpu.memory_space<vmem>>, vector<1x4x256xf32>
    %2 = vector.shape_cast %1 : vector<1x4x256xf32> to vector<4x256xf32>
    %cst = arith.constant dense<0.000000e+00> : vector<16x256xf32>
    %3 = tpu.matmul %0, %2, %cst {dimension_numbers = #tpu.dot_dimension_numbers<[1], [0], [0], [1], [0, 0, 1, 1], [], []>} : vector<16x4xf32>, vector<4x256xf32>, vector<16x256xf32> -> vector<16x256xf32>
    %c0_4 = arith.constant 0 : index
    %c0_5 = arith.constant 0 : index
    %4 = vector.load %arg5[%c0_4, %c0_5] : memref<16x4xf32, #tpu.memory_space<vmem>>, vector<16x4xf32>
    %c0_6 = arith.constant 0 : index
    %c0_7 = arith.constant 0 : index
    %c0_8 = arith.constant 0 : index
    %5 = vector.load %arg3[%c0_6, %c0_7, %c0_8] : memref<1x4x256xf32, #tpu.memory_space<vmem>>, vector<1x4x256xf32>
    %6 = vector.shape_cast %5 : vector<1x4x256xf32> to vector<4x256xf32>
    %cst_9 = arith.constant dense<0.000000e+00> : vector<16x256xf32>
    %7 = tpu.matmul %4, %6, %cst_9 {dimension_numbers = #tpu.dot_dimension_numbers<[1], [0], [0], [1], [0, 0, 1, 1], [], []>} : vector<16x4xf32>, vector<4x256xf32>, vector<16x256xf32> -> vector<16x256xf32>
    %8 = arith.addf %3, %7 : vector<16x256xf32>
    %c0_10 = arith.constant 0 : index
    %c0_11 = arith.constant 0 : index
    %9 = vector.load %arg6[%c0_10, %c0_11] : memref<16x1xf32, #tpu.memory_space<vmem>>, vector<16x1xf32>
    %10 = vector.broadcast %9 : vector<16x1xf32> to vector<16x256xf32>
    %11 = arith.addf %8, %10 : vector<16x256xf32>
    %cst_12 = arith.constant 0.000000e+00 : f32
    %12 = vector.broadcast %cst_12 : f32 to vector<16x256xf32>
    %13 = arith.maximumf %11, %12 : vector<16x256xf32>
    %cst_13 = arith.constant dense<0.000000e+00> : vector<16xf32>
    %14 = vector.multi_reduction <add>, %13, %cst_13 [1] : vector<16x256xf32> to vector<16xf32>
    %15 = vector.shape_cast %14 : vector<16xf32> to vector<16x1xf32>
    %c0_14 = arith.constant 0 : index
    %c0_15 = arith.constant 0 : index
    %c0_16 = arith.constant 0 : index
    %c0_17 = arith.constant 0 : index
    %16 = vector.load %arg7[%c0_14, %c0_15, %c0_16, %c0_17] : memref<1x1x16x1xf32, #tpu.memory_space<vmem>>, vector<1x1x16x1xf32>
    %17 = vector.shape_cast %16 : vector<1x1x16x1xf32> to vector<16x1xf32>
    %18 = vector.shape_cast %15 : vector<16x1xf32> to vector<1x1x16x1xf32>
    tpu.vector_store %arg7[%c0_14, %c0_15, %c0_16, %c0_17], %18 {strides = array<i32>} : memref<1x1x16x1xf32, #tpu.memory_space<vmem>>, vector<1x1x16x1xf32>,
    return
  }
  func.func @transform_0(%arg0: i32, %arg1: i32) -> (i32, i32, i32) {
    %c0_i32 = arith.constant 0 : i32
    %c0_i32_0 = arith.constant 0 : i32
    return %arg0, %c0_i32, %arg1 : i32, i32, i32
  }
  func.func @transform_1(%arg0: i32, %arg1: i32) -> (i32, i32, i32) {
    %c0_i32 = arith.constant 0 : i32
    %c0_i32_0 = arith.constant 0 : i32
    return %arg0, %c0_i32, %arg1 : i32, i32, i32
  }
  func.func @transform_2(%arg0: i32, %arg1: i32) -> (i32, i32) {
    %c0_i32 = arith.constant 0 : i32
    %c0_i32_0 = arith.constant 0 : i32
    %c0_i32_1 = arith.constant 0 : i32
    return %c0_i32, %c0_i32_0 : i32, i32
  }
  func.func @transform_3(%arg0: i32, %arg1: i32) -> (i32, i32) {
    %c0_i32 = arith.constant 0 : i32
    %c0_i32_0 = arith.constant 0 : i32
    %c0_i32_1 = arith.constant 0 : i32
    return %c0_i32, %c0_i32_0 : i32, i32
  }
  func.func @transform_4(%arg0: i32, %arg1: i32) -> (i32, i32) {
    %c0_i32 = arith.constant 0 : i32
    %c0_i32_0 = arith.constant 0 : i32
    %c0_i32_1 = arith.constant 0 : i32
    return %c0_i32, %c0_i32_0 : i32, i32
  }
  func.func @transform_5(%arg0: i32, %arg1: i32) -> (i32, i32, i32, i32) {
    %c0_i32 = arith.constant 0 : i32
    %c0_i32_0 = arith.constant 0 : i32
    %c0_i32_1 = arith.constant 0 : i32
    return %arg0, %arg1, %c0_i32, %c0_i32_0 : i32, i32, i32, i32
  }
}

</mosaic_0001>

<llo_original>
// kernel: tpu_custom_call.1
$region0: #{tpu_custom_call.1}
  #allocation0 [shape = 'u32[]', space=smem, size = 0x4, offset = 0x4, fixed_abs, tag = 'smem constant byte address 0x4 - core index']
  #allocation1 [shape = 'u32[72,128]{1,0:T(1,128)}', space=vmem, size = 0x9000, scoped, tag = 'internal scratch']
  %s0 = inlined_call_operand.vmem [shape: f32[2,4,256], index: 0, kind: input, shape index: {}]
  %s1 = inlined_call_operand.vmem [shape: f32[2,4,256], index: 1, kind: input, shape index: {}]
  %s2 = inlined_call_operand.vmem [shape: f32[16,4], index: 2, kind: input, shape index: {}]
  %s3 = inlined_call_operand.vmem [shape: f32[16,4], index: 3, kind: input, shape index: {}]
  %s4 = inlined_call_operand.vmem [shape: f32[16,1], index: 4, kind: input, shape index: {}]
  %s5 = inlined_call_operand.vmem [shape: f32[2,1,16,1], index: 5, kind: output, shape index: {}]
  %s6 = sld [smem:[#allocation0]]
  $region53: #{tpu_custom_call.1} parent=0
    _
  %s8 = ssub.s32 1, %s6
  %s9 = scalar_select 0, %s8, %s6
  loop: start=0, step=1, limit=4
  $region2: #{tpu_custom_call.1} parent=0 // loop_pre_header
    _
  $region3: #{tpu_custom_call.1} parent=0 // loop_header
    %s11 = sphi 0, %s15
    %p12 = scmp.ge.s32.totalorder %s11, 4
    %s18 = sphi 0, %s30
    %s19 = sphi 0, %s26
    %s20 = sphi 0, %s18
    %s21 = sphi 0, %s19
    %s22 = sphi 0, %s20
    %s23 = sphi 0, %s21
    %s35 = sphi 0, %s37
    %s38 = sphi 0, %s35
    %s39 = sphi 0, %s38
    %s55 = sphi 0, %s39
    %s63 = sphi 0, %s65
    %s66 = sphi 0, %s63
    %s67 = sphi 0, %s66
    %s83 = sphi 0, %s67
    %s87 = sphi 0, %s87
    %s89 = sphi 0, %s87
    %s90 = sphi 0, %s89
    %s104 = sphi 0, %s90
    %s108 = sphi 0, %s108
    %s110 = sphi 0, %s108
    %s111 = sphi 0, %s110
    %s125 = sphi 0, %s111
    %s129 = sphi 0, %s129
    %s131 = sphi 0, %s129
    %s132 = sphi 0, %s131
    %s146 = sphi 0, %s132
    %s154 = sphi 0, %s156
    %s157 = sphi 0, %s154
    %s158 = sphi 0, %s157
    %s174 = sphi 0, %s158
  $region4: #{tpu_custom_call.1} parent=0 // loop_header_branch
    %14 = sbr.rel (%p12) target = $region8
  $region5: #{tpu_custom_call.1} parent=0 // loop_body
    %s16 = ssub.s32 %s11, 1
    %s17 = ssub.s32 %s11, 2
    %s24 = sadd.s32 1, %s19
    %p25 = scmp.ge.s32.totalorder %s24, 1
    %s26 = scalar_select %p25, 0, %s24
    %s27 = sadd.s32 1, %s18
    %s28 = scalar_select %p25, %s27, %s18
    %p29 = scmp.ge.s32.totalorder %s28, 2
    %s30 = scalar_select %p29, 0, %s28
    %s31 = ssub.s32 %s18, %s30
    %s32 = ssub.s32 %s19, %s26
    %s33 = sor.u32 %s31, %s32
    %p34 = scmp.eq.s32.totalorder %s33, 0
    %s36 = sadd.s32 %s35, 1
    %s37 = scalar_select %p34, %s35, %s36
    %p40 = pneg %p34
    %p41 = scmp.eq.s32.totalorder %s11, 1
    %p42 = por %p40, %p41
    %p43 = scmp.ne.s32.totalorder %s35, %s38
    %p44 = scmp.eq.s32.totalorder %s11, 0
    %p45 = por %p43, %p44
    %p46 = scmp.ne.s32.totalorder %s35, %s38
    %p47 = scmp.eq.s32.totalorder %s16, 1
    %p48 = por %p46, %p47
    %p49 = scmp.ne.s32.totalorder %s38, %s39
    %p50 = scmp.eq.s32.totalorder %s16, 0
    %p51 = por %p49, %p50
    %p52 = scmp.ne.s32.totalorder %s38, %s39
    %p53 = scmp.eq.s32.totalorder %s17, 1
    %p54 = por %p52, %p53
    %p56 = scmp.ne.s32.totalorder %s39, %s55
    %p57 = scmp.eq.s32.totalorder %s17, 0
    %p58 = por %p56, %p57
    %s59 = ssub.s32 %s18, %s30
    %s60 = ssub.s32 %s19, %s26
    %s61 = sor.u32 %s59, %s60
    %p62 = scmp.eq.s32.totalorder %s61, 0
    %s64 = sadd.s32 %s63, 1
    %s65 = scalar_select %p62, %s63, %s64
    %p68 = pneg %p62
    %p69 = scmp.eq.s32.totalorder %s11, 1
    %p70 = por %p68, %p69
    %p71 = scmp.ne.s32.totalorder %s63, %s66
    %p72 = scmp.eq.s32.totalorder %s11, 0
    %p73 = por %p71, %p72
    %p74 = scmp.ne.s32.totalorder %s63, %s66
    %p75 = scmp.eq.s32.totalorder %s16, 1
    %p76 = por %p74, %p75
    %p77 = scmp.ne.s32.totalorder %s66, %s67
    %p78 = scmp.eq.s32.totalorder %s16, 0
    %p79 = por %p77, %p78
    %p80 = scmp.ne.s32.totalorder %s66, %s67
    %p81 = scmp.eq.s32.totalorder %s17, 1
    %p82 = por %p80, %p81
    %p84 = scmp.ne.s32.totalorder %s67, %s83
    %p85 = scmp.eq.s32.totalorder %s17, 0
    %p86 = por %p84, %p85
    %s88 = sadd.s32 %s87, 1
    %p91 = scmp.eq.s32.totalorder %s11, 1
    %p92 = scmp.ne.s32.totalorder %s87, %s89
    %p93 = scmp.eq.s32.totalorder %s11, 0
    %p94 = por %p92, %p93
    %p95 = scmp.ne.s32.totalorder %s87, %s89
    %p96 = scmp.eq.s32.totalorder %s16, 1
    %p97 = por %p95, %p96
    %p98 = scmp.ne.s32.totalorder %s89, %s90
    %p99 = scmp.eq.s32.totalorder %s16, 0
    %p100 = por %p98, %p99
    %p101 = scmp.ne.s32.totalorder %s89, %s90
    %p102 = scmp.eq.s32.totalorder %s17, 1
    %p103 = por %p101, %p102
    %p105 = scmp.ne.s32.totalorder %s90, %s104
    %p106 = scmp.eq.s32.totalorder %s17, 0
    %p107 = por %p105, %p106
    %s109 = sadd.s32 %s108, 1
    %p112 = scmp.eq.s32.totalorder %s11, 1
    %p113 = scmp.ne.s32.totalorder %s108, %s110
    %p114 = scmp.eq.s32.totalorder %s11, 0
    %p115 = por %p113, %p114
    %p116 = scmp.ne.s32.totalorder %s108, %s110
    %p117 = scmp.eq.s32.totalorder %s16, 1
    %p118 = por %p116, %p117
    %p119 = scmp.ne.s32.totalorder %s110, %s111
    %p120 = scmp.eq.s32.totalorder %s16, 0
    %p121 = por %p119, %p120
    %p122 = scmp.ne.s32.totalorder %s110, %s111
    %p123 = scmp.eq.s32.totalorder %s17, 1
    %p124 = por %p122, %p123
    %p126 = scmp.ne.s32.totalorder %s111, %s125
    %p127 = scmp.eq.s32.totalorder %s17, 0
    %p128 = por %p126, %p127
    %s130 = sadd.s32 %s129, 1
    %p133 = scmp.eq.s32.totalorder %s11, 1
    %p134 = scmp.ne.s32.totalorder %s129, %s131
    %p135 = scmp.eq.s32.totalorder %s11, 0
    %p136 = por %p134, %p135
    %p137 = scmp.ne.s32.totalorder %s129, %s131
    %p138 = scmp.eq.s32.totalorder %s16, 1
    %p139 = por %p137, %p138
    %p140 = scmp.ne.s32.totalorder %s131, %s132
    %p141 = scmp.eq.s32.totalorder %s16, 0
    %p142 = por %p140, %p141
    %p143 = scmp.ne.s32.totalorder %s131, %s132
    %p144 = scmp.eq.s32.totalorder %s17, 1
    %p145 = por %p143, %p144
    %p147 = scmp.ne.s32.totalorder %s132, %s146
    %p148 = scmp.eq.s32.totalorder %s17, 0
    %p149 = por %p147, %p148
    %s150 = ssub.s32 %s18, %s30
    %s151 = ssub.s32 %s19, %s26
    %s152 = sor.u32 %s150, %s151
    %p153 = scmp.eq.s32.totalorder %s152, 0
    %s155 = sadd.s32 %s154, 1
    %s156 = scalar_select %p153, %s154, %s155
    %p159 = pneg %p153
    %p160 = scmp.eq.s32.totalorder %s11, 1
    %p161 = por %p159, %p160
    %p162 = scmp.ne.s32.totalorder %s154, %s157
    %p163 = scmp.eq.s32.totalorder %s11, 0
    %p164 = por %p162, %p163
    %p165 = scmp.ne.s32.totalorder %s154, %s157
    %p166 = scmp.eq.s32.totalorder %s16, 1
    %p167 = por %p165, %p166
    %p168 = scmp.ne.s32.totalorder %s157, %s158
    %p169 = scmp.eq.s32.totalorder %s16, 0
    %p170 = por %p168, %p169
    %p171 = scmp.ne.s32.totalorder %s157, %s158
    %p172 = scmp.eq.s32.totalorder %s17, 1
    %p173 = por %p171, %p172
    %p175 = scmp.ne.s32.totalorder %s158, %s174
    %p176 = scmp.eq.s32.totalorder %s17, 0
    %p177 = por %p175, %p176
    %p178 = scmp.le.s32.totalorder 1, %s11
    %p179 = scmp.lt.s32.totalorder %s11, 3
    %p180 = pnand %p178, %p179
    %p181 = pneg %p180
    // Predicated region
    $region9: #{tpu_custom_call.1} parent=5 // pred_check
      _
    $region10: #{tpu_custom_call.1} parent=5 // pred_check_branch
      %183 = sbr.rel (%p180) target = $region12
    $region11: #{tpu_custom_call.1} parent=5 // pred_region
      %s184 = ssub.s32 %s11, 1
      // Predicated region
      $region13: #{tpu_custom_call.1} parent=11 // pred_check
        %p185 = pneg %p100
      $region14: #{tpu_custom_call.1} parent=11 // pred_check_branch
        %187 = sbr.rel (%p185) target = $region16
      $region15: #{tpu_custom_call.1} parent=11 // pred_region
        _
      $region16: #{tpu_custom_call.1} parent=11 // pred_fallthru
        _
      // Predicated region
      $region17: #{tpu_custom_call.1} parent=11 // pred_check
        %p188 = pneg %p121
      $region18: #{tpu_custom_call.1} parent=11 // pred_check_branch
        %190 = sbr.rel (%p188) target = $region20
      $region19: #{tpu_custom_call.1} parent=11 // pred_region
        _
      $region20: #{tpu_custom_call.1} parent=11 // pred_fallthru
        _
      // Predicated region
      $region21: #{tpu_custom_call.1} parent=11 // pred_check
        %p191 = pneg %p142
      $region22: #{tpu_custom_call.1} parent=11 // pred_check_branch
        %193 = sbr.rel (%p191) target = $region24
      $region23: #{tpu_custom_call.1} parent=11 // pred_region
        _
      $region24: #{tpu_custom_call.1} parent=11 // pred_fallthru
        _
    $region12: #{tpu_custom_call.1} parent=5 // pred_fallthru
      _
    %p194 = scmp.lt.s32.totalorder %s11, 2
    // Predicated region
    $region25: #{tpu_custom_call.1} parent=5 // pred_check
      %p195 = pneg %p194
    $region26: #{tpu_custom_call.1} parent=5 // pred_check_branch
      %197 = sbr.rel (%p195) target = $region28
    $region27: #{tpu_custom_call.1} parent=5 // pred_region
      // Predicated region
      $region29: #{tpu_custom_call.1} parent=27 // pred_check
        %p198 = pneg %p45
      $region30: #{tpu_custom_call.1} parent=27 // pred_check_branch
        %200 = sbr.rel (%p198) target = $region32
      $region31: #{tpu_custom_call.1} parent=27 // pred_region
        %s201 = smul.u32 2, %s19
        %p202 = scmp.lt.s32.totalorder %s18, 1
        %s203 = scalar_select %p202, %s18, 1
        %p204 = scmp.lt.s32.totalorder %s201, 1
        %s205 = scalar_select %p204, %s201, 1
        %s206 = smul.addr %s203, 2
        %s207 = sadd.s32 %s205, %s206
        %s208 = smul.addr %s207, 4
        %s209 = scalar_lea.vmem %s0, %s208
        %s210 = smul.u32 2, %s19
      $region32: #{tpu_custom_call.1} parent=27 // pred_fallthru
        _
      // Predicated region
      $region33: #{tpu_custom_call.1} parent=27 // pred_check
        %p211 = pneg %p73
      $region34: #{tpu_custom_call.1} parent=27 // pred_check_branch
        %213 = sbr.rel (%p211) target = $region36
      $region35: #{tpu_custom_call.1} parent=27 // pred_region
        %s214 = smul.u32 2, %s19
        %p215 = scmp.lt.s32.totalorder %s18, 1
        %s216 = scalar_select %p215, %s18, 1
        %p217 = scmp.lt.s32.totalorder %s214, 1
        %s218 = scalar_select %p217, %s214, 1
        %s219 = smul.addr %s216, 2
        %s220 = sadd.s32 %s218, %s219
        %s221 = smul.addr %s220, 4
        %s222 = scalar_lea.vmem %s1, %s221
        %s223 = smul.u32 2, %s19
      $region36: #{tpu_custom_call.1} parent=27 // pred_fallthru
        _
    $region28: #{tpu_custom_call.1} parent=5 // pred_fallthru
      _
    %p224 = scmp.le.s32.totalorder 1, %s11
    %p225 = scmp.lt.s32.totalorder %s11, 3
    %p226 = pnand %p224, %p225
    %p227 = pneg %p226
    // Predicated region
    $region37: #{tpu_custom_call.1} parent=5 // pred_check
      _
    $region38: #{tpu_custom_call.1} parent=5 // pred_check_branch
      %229 = sbr.rel (%p226) target = $region40
    $region39: #{tpu_custom_call.1} parent=5 // pred_region
      %s230 = ssub.s32 %s11, 1
      %s231 = smul.u32 2, %s21
      %p232 = scmp.lt.s32.totalorder %s20, 1
      %s233 = scalar_select %p232, %s20, 1
      %p234 = scmp.lt.s32.totalorder %s231, 1
      %s235 = scalar_select %p234, %s231, 1
      %s236 = smul.addr %s233, 2
      %s237 = sadd.s32 %s235, %s236
      %s238 = smul.addr %s237, 4
      %s239 = scalar_lea.vmem %s0, %s238
      %p240 = pneg %p51
      %p241 = pneg %p48
      %s242 = smul.u32 2, %s21
      %p243 = scmp.lt.s32.totalorder %s20, 1
      %s244 = scalar_select %p243, %s20, 1
      %p245 = scmp.lt.s32.totalorder %s242, 1
      %s246 = scalar_select %p245, %s242, 1
      %s247 = smul.addr %s244, 2
      %s248 = sadd.s32 %s246, %s247
      %s249 = smul.addr %s248, 4
      %s250 = scalar_lea.vmem %s1, %s249
      %p251 = pneg %p79
      %p252 = pneg %p76
      %p253 = pneg %p100
      %p254 = pneg %p97
      %p255 = pneg %p121
      %p256 = pneg %p118
      %p257 = pneg %p142
      %p258 = pneg %p139
      %p259 = pneg %p170
      %p260 = pneg %p167
      %p261 = scmp.lt.s32.totalorder %s20, 1
      %s262 = scalar_select %p261, %s20, 1
      %p263 = scmp.lt.s32.totalorder %s21, 0
      %s264 = scalar_select %p263, %s21, 0
      %s265 = smul.addr %s264, 2
      %s266 = smul.addr %s262, 2
      %s267 = sadd.s32 %s265, %s266
      %s268 = smul.addr %s267, 8
      %s269 = scalar_lea.vmem %s5, %s268
      %s270 = smul.u32 2, %s21
      %p271 = scmp.lt.s32.totalorder %s20, 1
      %s272 = scalar_select %p271, %s20, 1
      %p273 = scmp.lt.s32.totalorder %s270, 1
      %s274 = scalar_select %p273, %s270, 1
      %s275 = smul.addr %s272, 2
      %s276 = sadd.s32 %s274, %s275
      %s277 = smul.addr %s276, 4
      %s278 = scalar_lea.vmem %s0, %s277
      %s279 = smul.u32 2, %s21
      %s280 = smul.u32 2, %s21
      %p281 = scmp.lt.s32.totalorder %s20, 1
      %s282 = scalar_select %p281, %s20, 1
      %p283 = scmp.lt.s32.totalorder %s280, 1
      %s284 = scalar_select %p283, %s280, 1
      %s285 = smul.addr %s282, 2
      %s286 = sadd.s32 %s284, %s285
      %s287 = smul.addr %s286, 4
      %s288 = scalar_lea.vmem %s1, %s287
      %s289 = smul.u32 2, %s21
      %p290 = scmp.lt.s32.totalorder %s20, 1
      %s291 = scalar_select %p290, %s20, 1
      %p292 = scmp.lt.s32.totalorder %s21, 0
      %s293 = scalar_select %p292, %s21, 0
      %s294 = smul.addr %s293, 2
      %s295 = smul.addr %s291, 2
      %s296 = sadd.s32 %s294, %s295
      %s297 = smul.addr %s296, 8
      %s298 = scalar_lea.vmem %s5, %s297
      %v299 = vld [vmem:[%s2] sm:$0xff]
      %v300 = vld [vmem:[%s2 + $0x8] sm:$0xff]
      %v301 = vld [vmem:[%s278] sm:$0xff]
      %v302 = vld [vmem:[%s3] sm:$0xff]
      %v303 = vld [vmem:[%s3 + $0x8] sm:$0xff]
      %v304 = vld [vmem:[%s288] sm:$0xff]
      %306 = vst [vmem:[#allocation1] ss:$2 sm:$0xff] %v304
      %v307 = vld.sshfl [vmem:[#allocation1] sm:$0xff pattern:$0x75316420]
      %v308 = vld.sshfl [vmem:[#allocation1 + $0x8] sm:$0xff pattern:$0x75316420]
      %vm309 = vcmask 31744
      %v311 = vsel %vm309, %v302, 0
      %v314 = vsel %vm309, %v303, 0
      %vm316 = vcmask 1043456
      %v317 = vsel %vm316, %v307, 0
      %v319 = vsel %vm316, %v308, 0
      %321 = vmatpush.msra.mxu0 0.0
      %322 = vmatpush.msra.mxu0 0.0
      %323 = vmatpush.msra.mxu0 0.0
      %324 = vmatpush.msra.mxu0 0.0
      %325 = vmatpush.msra.mxu0 0.0
      %326 = vmatpush.msra.mxu0 0.0
      %327 = vmatpush.msra.mxu0 0.0
      %328 = vmatpush.msra.mxu0 0.0
      %329 = vmatpush.msra.mxu0 0.0
      %330 = vmatpush.msra.mxu0 0.0
      %331 = vmatpush.msra.mxu0 0.0
      %332 = vmatpush.msra.mxu0 0.0
      %333 = vmatpush.msra.mxu0 0.0
      %334 = vmatpush.msra.mxu0 0.0
      %335 = vmatpush.msra.mxu0 0.0
      %336 = vmatpush.msra.mxu0 %v317
      %337 = vmatmul.f32.gmra.mxu0 %v311
      %v338 = vpop.f32.mrf.mxu0
      %v339 = vadd.f32 0.0, %v338
      %340 = vmatmul.f32.gmra.mxu0 %v314
      %v341 = vpop.f32.mrf.mxu0
      %v342 = vadd.f32 0.0, %v341
      %343 = vdwg.mxu0
      %344 = vmatpush.msra.mxu0 0.0
      %345 = vmatpush.msra.mxu0 0.0
      %346 = vmatpush.msra.mxu0 0.0
      %347 = vmatpush.msra.mxu0 0.0
      %348 = vmatpush.msra.mxu0 0.0
      %349 = vmatpush.msra.mxu0 0.0
      %350 = vmatpush.msra.mxu0 0.0
      %351 = vmatpush.msra.mxu0 0.0
      %352 = vmatpush.msra.mxu0 0.0
      %353 = vmatpush.msra.mxu0 0.0
      %354 = vmatpush.msra.mxu0 0.0
      %355 = vmatpush.msra.mxu0 0.0
      %356 = vmatpush.msra.mxu0 0.0
      %357 = vmatpush.msra.mxu0 0.0
      %358 = vmatpush.msra.mxu0 0.0
      %359 = vmatpush.msra.mxu0 %v319
      %360 = vmatmul.f32.gmra.mxu0 %v311
      %v361 = vpop.f32.mrf.mxu0
      %v362 = vadd.f32 0.0, %v361
      %363 = vmatmul.f32.gmra.mxu0 %v314
      %v364 = vpop.f32.mrf.mxu0
      %v365 = vadd.f32 0.0, %v364
      %366 = vdwg.mxu0
      %368 = vst [vmem:[#allocation1] ss:$2 sm:$0xff] %v301
      %v369 = vld.sshfl [vmem:[#allocation1] sm:$0xff pattern:$0x75316420]
      %v370 = vld.sshfl [vmem:[#allocation1 + $0x8] sm:$0xff pattern:$0x75316420]
      %v372 = vsel %vm309, %v299, 0
      %v375 = vsel %vm309, %v300, 0
      %v377 = vsel %vm316, %v369, 0
      %v379 = vsel %vm316, %v370, 0
      %381 = vmatpush.msra.mxu0 0.0
      %382 = vmatpush.msra.mxu0 0.0
      %383 = vmatpush.msra.mxu0 0.0
      %384 = vmatpush.msra.mxu0 0.0
      %385 = vmatpush.msra.mxu0 0.0
      %386 = vmatpush.msra.mxu0 0.0
      %387 = vmatpush.msra.mxu0 0.0
      %388 = vmatpush.msra.mxu0 0.0
      %389 = vmatpush.msra.mxu0 0.0
      %390 = vmatpush.msra.mxu0 0.0
      %391 = vmatpush.msra.mxu0 0.0
      %392 = vmatpush.msra.mxu0 0.0
      %393 = vmatpush.msra.mxu0 0.0
      %394 = vmatpush.msra.mxu0 0.0
      %395 = vmatpush.msra.mxu0 0.0
      %396 = vmatpush.msra.mxu0 %v377
      %397 = vmatmul.f32.gmra.mxu0 %v372
      %v398 = vpop.f32.mrf.mxu0
      %v399 = vadd.f32 %v339, %v398
      %400 = vmatmul.f32.gmra.mxu0 %v375
      %v401 = vpop.f32.mrf.mxu0
      %v402 = vadd.f32 %v342, %v401
      %403 = vdwg.mxu0
      %404 = vmatpush.msra.mxu0 0.0
      %405 = vmatpush.msra.mxu0 0.0
      %406 = vmatpush.msra.mxu0 0.0
      %407 = vmatpush.msra.mxu0 0.0
      %408 = vmatpush.msra.mxu0 0.0
      %409 = vmatpush.msra.mxu0 0.0
      %410 = vmatpush.msra.mxu0 0.0
      %411 = vmatpush.msra.mxu0 0.0
      %412 = vmatpush.msra.mxu0 0.0
      %413 = vmatpush.msra.mxu0 0.0
      %414 = vmatpush.msra.mxu0 0.0
      %415 = vmatpush.msra.mxu0 0.0
      %416 = vmatpush.msra.mxu0 0.0
      %417 = vmatpush.msra.mxu0 0.0
      %418 = vmatpush.msra.mxu0 0.0
      %419 = vmatpush.msra.mxu0 %v379
      %420 = vmatmul.f32.gmra.mxu0 %v372
      %v421 = vpop.f32.mrf.mxu0
      %v422 = vadd.f32 %v362, %v421
      %423 = vmatmul.f32.gmra.mxu0 %v375
      %v424 = vpop.f32.mrf.mxu0
      %v425 = vadd.f32 %v365, %v424
      %426 = vdwg.mxu0
      %v427 = vld [vmem:[%s4] sm:$0xff]
      %v428 = vld [vmem:[%s4 + $0x8] sm:$0xff]
      %430 = vset.pattern.permute.xlu0 0
      %431 = vperm.xlu0 %430, %v427
      %v432 = vpop.permute.xlu0 %431
      %435 = vset.pattern.permute.xlu0 0
      %436 = vperm.xlu0 %435, %v428
      %v437 = vpop.permute.xlu0 %436
      %v439 = vadd.f32 %v399, %v432
      %v440 = vadd.f32 %v422, %v432
      %v441 = vadd.f32 %v402, %v437
      %v442 = vadd.f32 %v425, %v437
      %v443 = vmax.f32 %v439, 0.0
      %v444 = vmax.f32 %v440, 0.0
      %v445 = vmax.f32 %v441, 0.0
      %v446 = vmax.f32 %v442, 0.0
      %v447 = vadd.f32 %v443, %v444
      %448 = vadd.xlane.f32.xlu0 %v447
      %v449 = vpop.xlane.xlu0 %448
      %v450 = vadd.f32 %v445, %v446
      %451 = vadd.xlane.f32.xlu0 %v450
      %v452 = vpop.xlane.xlu0 %451
      %vm453 = vcmask 7168
      %454 = vst.msk [vmem:[%s298] sm:$0xff] %vm453, %v449
      %455 = vst.msk [vmem:[%s298 + $0x8] sm:$0xff] %vm453, %v452
      %p456 = scmp.lt.s32.totalorder %s20, 1
      %s457 = scalar_select %p456, %s20, 1
      %p458 = scmp.lt.s32.totalorder %s21, 0
      %s459 = scalar_select %p458, %s21, 0
      %s460 = smul.addr %s459, 2
      %s461 = smul.addr %s457, 2
      %s462 = sadd.s32 %s460, %s461
      %s463 = smul.addr %s462, 8
      %s464 = scalar_lea.vmem %s5, %s463
      // Predicated region
      $region41: #{tpu_custom_call.1} parent=39 // pred_check
        %p465 = pneg %p167
      $region42: #{tpu_custom_call.1} parent=39 // pred_check_branch
        %467 = sbr.rel (%p465) target = $region44
      $region43: #{tpu_custom_call.1} parent=39 // pred_region
        _
      $region44: #{tpu_custom_call.1} parent=39 // pred_fallthru
        _
    $region40: #{tpu_custom_call.1} parent=5 // pred_fallthru
      _
    %p468 = scmp.le.s32.totalorder 2, %s11
    // Predicated region
    $region45: #{tpu_custom_call.1} parent=5 // pred_check
      %p469 = pneg %p468
    $region46: #{tpu_custom_call.1} parent=5 // pred_check_branch
      %471 = sbr.rel (%p469) target = $region48
    $region47: #{tpu_custom_call.1} parent=5 // pred_region
      %s472 = ssub.s32 %s11, 2
      // Predicated region
      $region49: #{tpu_custom_call.1} parent=47 // pred_check
        %p473 = pneg %p173
      $region50: #{tpu_custom_call.1} parent=47 // pred_check_branch
        %475 = sbr.rel (%p473) target = $region52
      $region51: #{tpu_custom_call.1} parent=47 // pred_region
        %p476 = scmp.lt.s32.totalorder %s22, 1
        %s477 = scalar_select %p476, %s22, 1
        %p478 = scmp.lt.s32.totalorder %s23, 0
        %s479 = scalar_select %p478, %s23, 0
        %s480 = smul.addr %s479, 2
        %s481 = smul.addr %s477, 2
        %s482 = sadd.s32 %s480, %s481
        %s483 = smul.addr %s482, 8
        %s484 = scalar_lea.vmem %s5, %s483
      $region52: #{tpu_custom_call.1} parent=47 // pred_fallthru
        _
    $region48: #{tpu_custom_call.1} parent=5 // pred_fallthru
      _
  $region6: #{tpu_custom_call.1} parent=0 // loop_footer
    %s15 = sadd.s32 1, %s11
  $region7: #{tpu_custom_call.1} parent=0 // loop_footer_branch
    %10 = sbr.rel target = $region3
  $region8: #{tpu_custom_call.1} parent=0 // loop_exit
    _

</llo_original>
